<compile_context>
chip_gen: v6e
topology: v6e:2x2x1
jax: 0.10.0
libtpu: 0.0.40
codegen_flags: <defaults>
</compile_context>

<pallas_src>
import jax
import jax.numpy as jnp
from jax import lax
from jax.experimental import pallas as pl
from jax.experimental.pallas import tpu as pltpu


# ----------------------------------------------------------------------------
# VMEM budget / tiling heuristics
# ----------------------------------------------------------------------------
def _vmem_capacity_bytes():
    try:
        return int(pltpu.get_tpu_info().vmem_capacity_bytes)
    except Exception:
        return 64 * 1024 * 1024            # v7x-safe fallback


def _vmem_budgets():
    cap = _vmem_capacity_bytes()           # 128 MiB v5e/v6e, 64 MiB v7x
    input_budget = cap // 2                # double-buffered kernel inputs
    vmem_limit = min(cap - (8 << 20), input_budget + (32 << 20))
    vmem_limit = max(int(vmem_limit), 32 << 20)
    return input_budget, vmem_limit


def _largest_divisor_leq(n, cap):
    cap = max(1, min(int(cap), int(n)))
    for d in range(cap, 0, -1):
        if n % d == 0:
            return d
    return 1


def _chunk_size(length, fused_m, target):
    # keep the transient (fused_m, chunk) f32 sim tile around <= 128 KiB
    max_chunk = max(128, (128 * 1024) // (4 * max(int(fused_m), 1)))
    return max(1, min(int(target), max_chunk, int(length)))


def _chunk_list(length, chunk):
    # static (start, size) list; the trailing chunk may be a remainder, so no
    # padding / -inf masking is needed and odd lengths avoid a perf cliff.
    return [(s, min(chunk, length - s)) for s in range(0, length, chunk)]


# ----------------------------------------------------------------------------
# In-kernel MaxSim helpers (all loops are short static Python loops; the only
# cross-iteration live state is the (rows, Nq, 1) / (M, 1) running max).
# ----------------------------------------------------------------------------
def _maxsim_rows(q, doc_ref, row0, rows, chunks):
    """sum_n max_s q[b,n,:] . doc_ref[row0+b,s,:]  ->  (rows, 1) f32.

    Block-diagonal (per-batch-item) MaxSim via a batched matmul per chunk;
    the chunk max is folded immediately (running max init from chunk 0)."""
    m = None
    for (st, cs) in chunks:
        dblk = doc_ref[row0:row0 + rows, st:st + cs, :]          # (rows, cs, D)
        sim = jnp.einsum('bnd,bsd->bns', q, dblk,
                         preferred_element_type=jnp.float32)     # (rows, Nq, cs)
        cm = jnp.max(sim, axis=2, keepdims=True)                 # (rows, Nq, 1)
        m = cm if m is None else jnp.maximum(m, cm)
    return jnp.sum(m, axis=1)                                    # (rows, 1)


def _maxsim_fused(q2d, doc_ref, c, chunks):
    """max_s q2d[m,:] . doc_ref[c,s,:]  ->  (M, 1) f32 with a wide-M matmul."""
    m = None
    for (st, cs) in chunks:
        dblk = doc_ref[c, st:st + cs, :]                         # (cs, D)
        sim = lax.dot_general(q2d, dblk, (((1,), (1,)), ((), ())),
                              preferred_element_type=jnp.float32)  # (M, cs)
        cm = jnp.max(sim, axis=1, keepdims=True)                 # (M, 1)
        m = cm if m is None else jnp.maximum(m, cm)
    return m


# ----------------------------------------------------------------------------
# Kernel 1 (in_batch_term=False): per-batch pos/neg late-interaction scores.
# Grid = (B // b_blk,).  Each step reads b_blk batches of q / doc / neg-doc
# once and writes a (b_blk, 2) block (col 0 = pos, col 1 = neg).
# ----------------------------------------------------------------------------
def _make_pairwise_kernel(b_blk, chunks_pos, chunks_neg):
    def kernel(q_ref, d_ref, nd_ref, out_ref):
        q = q_ref[...]                                           # (b_blk, Nq, D)
        out_ref[:, 0:1] = _maxsim_rows(q, d_ref, 0, b_blk, chunks_pos)
        out_ref[:, 1:2] = _maxsim_rows(q, nd_ref, 0, b_blk, chunks_neg)
    return kernel


def pairwise_scores(q, d, nd, *, doc_chunk_target=256):
    B, Nq, D = q.shape
    Nd, Nn = d.shape[1], nd.shape[1]
    isz = jnp.dtype(q.dtype).itemsize
    input_budget, vmem_limit = _vmem_budgets()

    per_item = (Nq + Nd + Nn) * D * isz
    b_cap = max(1, input_budget // (2 * per_item))
    b_blk = _largest_divisor_leq(B, min(b_cap, 8))
    fused_m = b_blk * Nq
    chunks_pos = _chunk_list(Nd, _chunk_size(Nd, fused_m, doc_chunk_target))
    chunks_neg = _chunk_list(Nn, _chunk_size(Nn, fused_m, doc_chunk_target))
    nb = B // b_blk

    out = pl.pallas_call(
        _make_pairwise_kernel(b_blk, chunks_pos, chunks_neg),
        out_shape=jax.ShapeDtypeStruct((nb, b_blk, 2), jnp.float32),
        grid_spec=pltpu.PrefetchScalarGridSpec(
            num_scalar_prefetch=0,
            grid=(nb,),
            in_specs=[
                pl.BlockSpec((b_blk, Nq, D), lambda i: (i, 0, 0)),
                pl.BlockSpec((b_blk, Nd, D), lambda i: (i, 0, 0)),
                pl.BlockSpec((b_blk, Nn, D), lambda i: (i, 0, 0)),
            ],
            out_specs=pl.BlockSpec((None, b_blk, 2), lambda i: (i, 0, 0)),
        ),
        compiler_params=pltpu.CompilerParams(
            dimension_semantics=("parallel",),
            vmem_limit_bytes=vmem_limit),
    )(q, d, nd)
    return out[:, :, 0].reshape(B), out[:, :, 1].reshape(B)


# ----------------------------------------------------------------------------
# Kernel 2 (in_batch_term=True): BxB in-batch score matrix + neg-doc scores.
#   scores[b, c]  = sum_n max_s q[b,n,:] . d[c,s,:]
#   negsc[b]      = sum_n max_s q[b,n,:] . nd[b,s,:]   (computed once, j == 0)
# Grid = (B//rb, B//cb), columns j innermost so q / neg-doc / negsc stay
# VMEM-resident across the whole doc-column axis.
# ----------------------------------------------------------------------------
def _make_in_batch_kernel(rb, cb, g_rb, Nq, chunks_d, chunks_nd):
    n_groups = rb // g_rb

    def kernel(q_ref, d_ref, nd_ref, scores_ref, neg_ref):
        # neg-doc scores: only once per row block (first doc-column step)
        @pl.when(pl.program_id(1) == 0)
        def _():
            for g in range(n_groups):                       # static, small
                r0 = g * g_rb
                qg = q_ref[r0:r0 + g_rb, :, :]              # (g_rb, Nq, D)
                neg_ref[r0:r0 + g_rb, :] = _maxsim_rows(
                    qg, nd_ref, r0, g_rb, chunks_nd)

        # in-batch scores: fused wide-M matmul per doc column
        for g in range(n_groups):                           # static, small
            r0 = g * g_rb
            qg = q_ref[r0:r0 + g_rb, :, :]                  # (g_rb, Nq, D)
            q2d = qg.reshape(g_rb * Nq, qg.shape[-1])       # (M, D), M ~ 128-256
            for c in range(cb):                             # static, small
                m = _maxsim_fused(q2d, d_ref, c, chunks_d)  # (M, 1)
                col = jnp.sum(m.reshape(g_rb, Nq, 1), axis=1)   # (g_rb, 1)
                scores_ref[r0:r0 + g_rb, c:c + 1] = col

    return kernel


def in_batch_scores(q, d, nd, *, doc_chunk_target=256):
    B, Nq, D = q.shape
    Nd, Nn = d.shape[1], nd.shape[1]
    isz = jnp.dtype(q.dtype).itemsize
    input_budget, vmem_limit = _vmem_budgets()

    # Bias the VMEM budget toward the row (query + neg-doc) block: doc HBM
    # traffic is ~ B^2*Nd*D/rb, so rb is the main bandwidth lever.
    row_item = (Nq + Nn) * D * isz
    row_budget = (3 * input_budget) // 5
    rb_cap = max(1, row_budget // (2 * row_item))
    rb = _largest_divisor_leq(B, min(rb_cap, 32))

    col_item = Nd * D * isz
    col_budget = max(input_budget - 2 * rb * row_item, 2 * col_item)
    cb_cap = max(1, col_budget // (2 * col_item))
    cb = _largest_divisor_leq(B, min(cb_cap, 8))

    # Row groups so the fused matmul M = g_rb * Nq stays around 128-256.
    g_rb = _largest_divisor_leq(rb, max(1, 256 // max(Nq, 1)))
    fused_m = g_rb * Nq
    chunks_d = _chunk_list(Nd, _chunk_size(Nd, fused_m, doc_chunk_target))
    chunks_nd = _chunk_list(Nn, _chunk_size(Nn, fused_m, doc_chunk_target))

    nr, nc = B // rb, B // cb
    scores4, negsc = pl.pallas_call(
        _make_in_batch_kernel(rb, cb, g_rb, Nq, chunks_d, chunks_nd),
        out_shape=(
            jax.ShapeDtypeStruct((nr, nc, rb, cb), jnp.float32),
            jax.ShapeDtypeStruct((nr, rb, 1), jnp.float32),
        ),
        grid_spec=pltpu.PrefetchScalarGridSpec(
            num_scalar_prefetch=0,
            grid=(nr, nc),
            in_specs=[
                pl.BlockSpec((rb, Nq, D), lambda i, j: (i, 0, 0)),
                pl.BlockSpec((cb, Nd, D), lambda i, j: (j, 0, 0)),
                pl.BlockSpec((rb, Nn, D), lambda i, j: (i, 0, 0)),
            ],
            out_specs=(
                pl.BlockSpec((None, None, rb, cb), lambda i, j: (i, j, 0, 0)),
                pl.BlockSpec((None, rb, 1), lambda i, j: (i, 0, 0)),
            ),
        ),
        compiler_params=pltpu.CompilerParams(
            # negsc block is resident across the doc-column axis -> arbitrary
            dimension_semantics=("parallel", "arbitrary"),
            vmem_limit_bytes=vmem_limit),
    )(q, d, nd)

    scores = jnp.transpose(scores4, (0, 2, 1, 3)).reshape(B, B)
    return scores, negsc.reshape(B)


# ----------------------------------------------------------------------------
# Module wrapper
# ----------------------------------------------------------------------------
class ColbertPairwiseNegativeCELoss:
    """JAX/Pallas port of colpali_engine ColbertPairwiseNegativeCELoss.

    compute_dtype: optional dtype (e.g. jnp.bfloat16) for the kernel inputs
    (halves HBM traffic of these memory-bound kernels); matmuls always
    accumulate in float32.
    """

    def __init__(self, in_batch_term=False, compute_dtype=None,
                 doc_chunk_target=256):
        # torch __init__ also builds a CrossEntropyLoss that forward never
        # uses -> nothing to set up here.
        self.in_batch_term = in_batch_term
        self.compute_dtype = compute_dtype
        self.doc_chunk_target = doc_chunk_target

    def __call__(self, query_embeddings, doc_embeddings, neg_doc_embeddings):
        q, d, nd = query_embeddings, doc_embeddings, neg_doc_embeddings
        if self.compute_dtype is not None:
            q = q.astype(self.compute_dtype)
            d = d.astype(self.compute_dtype)
            nd = nd.astype(self.compute_dtype)

        if self.in_batch_term:
            # One fused kernel: pos scores are the diagonal of the in-batch
            # score matrix, neg-doc scores come from the same pass.
            scores, neg_scores = in_batch_scores(
                q, d, nd, doc_chunk_target=self.doc_chunk_target)
            pos_scores = jnp.diagonal(scores)
            loss = jnp.mean(jax.nn.softplus(neg_scores - pos_scores))
            neg_ib = jnp.max(
                scores - jnp.eye(scores.shape[0], dtype=scores.dtype) * 1e6,
                axis=1)
            loss = loss + jnp.mean(jax.nn.softplus(neg_ib - pos_scores))
        else:
            pos_scores, neg_scores = pairwise_scores(
                q, d, nd, doc_chunk_target=self.doc_chunk_target)
            loss = jnp.mean(jax.nn.softplus(neg_scores - pos_scores))

        return loss / 2


# ----------------------------------------------------------------------------
# Pure-JAX reference (mirrors the torch forward) for correctness checks.
# ----------------------------------------------------------------------------
def _reference_loss(q, d, nd, in_batch_term=False):
    pos = jnp.einsum('bnd,bsd->bns', q, d).max(axis=2).sum(axis=1)
    neg = jnp.einsum('bnd,bsd->bns', q, nd).max(axis=2).sum(axis=1)
    loss = jnp.mean(jax.nn.softplus(neg - pos))
    if in_batch_term:
        scores = jnp.einsum('bnd,csd->bcns', q, d).max(axis=3).sum(axis=2)
        pos_s = jnp.diagonal(scores)
        neg_s = jnp.max(scores - jnp.eye(scores.shape[0]) * 1e6, axis=1)
        loss = loss + jnp.mean(jax.nn.softplus(neg_s - pos_s))
    return loss / 2


if __name__ == "__main__":
    key = jax.random.PRNGKey(0)
    k_q, k_d, k_n = jax.random.split(key, 3)

    B, Nq, Nd, Nn, D = 4, 16, 48, 32, 64
    q = jax.random.normal(k_q, (B, Nq, D), dtype=jnp.float32)
    d = jax.random.normal(k_d, (B, Nd, D), dtype=jnp.float32)
    nd = jax.random.normal(k_n, (B, Nn, D), dtype=jnp.float32)

    # 1) Default config (pairwise kernel only, f32).
    loss = jax.block_until_ready(ColbertPairwiseNegativeCELoss()(q, d, nd))
    ref = _reference_loss(q, d, nd, in_batch_term=False)
    assert jnp.allclose(loss, ref, atol=5e-3, rtol=5e-3), (loss, ref)

    # 2) In-batch term: single fused kernel, small chunk target exercises the
    #    multi-chunk + remainder-chunk online-max path (Nd=48, chunk=32).
    loss_ib = jax.block_until_ready(
        ColbertPairwiseNegativeCELoss(in_batch_term=True,
                                      doc_chunk_target=32)(q, d, nd))
    ref_ib = _reference_loss(q, d, nd, in_batch_term=True)
    assert jnp.allclose(loss_ib, ref_ib, atol=5e-3, rtol=5e-3), (loss_ib, ref_ib)

    # 3) bf16 compute path (compare against a bf16-rounded-input reference).
    loss_bf = jax.block_until_ready(
        ColbertPairwiseNegativeCELoss(compute_dtype=jnp.bfloat16)(q, d, nd))
    qb = q.astype(jnp.bfloat16).astype(jnp.float32)
    db = d.astype(jnp.bfloat16).astype(jnp.float32)
    ndb = nd.astype(jnp.bfloat16).astype(jnp.float32)
    ref_bf = _reference_loss(qb, db, ndb, in_batch_term=False)
    assert jnp.allclose(loss_bf, ref_bf, atol=2e-2, rtol=2e-2), (loss_bf, ref_bf)

    print("KERNEL_OK")
</pallas_src>

<mosaic_0001>
module attributes {stable_mosaic.version = 11 : i64} {
  func.func @kernel(%arg0: i32, %arg1: memref<4x16x64xf32, #tpu.memory_space<vmem>>, %arg2: memref<4x48x64xf32, #tpu.memory_space<vmem>>, %arg3: memref<4x32x64xf32, #tpu.memory_space<vmem>>, %arg4: memref<1x4x2xf32, #tpu.memory_space<vmem>>) attributes {dimension_semantics = [#tpu.dimension_semantics<parallel>], iteration_bounds = array<i64: 1>, scalar_prefetch = 0 : i64, scratch_operands = 0 : i64, tpu.core_type = #tpu.core_type<tc>, window_params = [{transform_indices = @transform_0, window_bounds = array<i64: 4, 16, 64>}, {transform_indices = @transform_1, window_bounds = array<i64: 4, 48, 64>}, {transform_indices = @transform_2, window_bounds = array<i64: 4, 32, 64>}, {transform_indices = @transform_3, window_bounds = array<i64: 1, 4, 2>}]} {
    %c0 = arith.constant 0 : index
    %c0_0 = arith.constant 0 : index
    %c0_1 = arith.constant 0 : index
    %0 = vector.load %arg1[%c0, %c0_0, %c0_1] : memref<4x16x64xf32, #tpu.memory_space<vmem>>, vector<4x16x64xf32>
    %c0_2 = arith.constant 0 : index
    %c0_3 = arith.constant 0 : index
    %c0_4 = arith.constant 0 : index
    %1 = vector.load %arg2[%c0_2, %c0_3, %c0_4] : memref<4x48x64xf32, #tpu.memory_space<vmem>>, vector<4x48x64xf32>
    "tpu.trace_start"() <{level = 10 : i32, message = "bnd,bsd->bns"}> : () -> ()
    %cst = arith.constant dense<0.000000e+00> : vector<4x16x48xf32>
    %2 = tpu.matmul %0, %1, %cst {dimension_numbers = #tpu.dot_dimension_numbers<[2], [2], [1], [1], [0, 0, 0, 1, 1, 1], [0], [0]>} : vector<4x16x64xf32>, vector<4x48x64xf32>, vector<4x16x48xf32> -> vector<4x16x48xf32>
    "tpu.trace_stop"() : () -> ()
    %cst_5 = arith.constant dense<0xFF800000> : vector<4x16xf32>
    %3 = vector.multi_reduction <maximumf>, %2, %cst_5 [2] : vector<4x16x48xf32> to vector<4x16xf32>
    %4 = vector.shape_cast %3 : vector<4x16xf32> to vector<4x16x1xf32>
    %cst_6 = arith.constant dense<0.000000e+00> : vector<4x1xf32>
    %5 = vector.multi_reduction <add>, %4, %cst_6 [1] : vector<4x16x1xf32> to vector<4x1xf32>
    %c0_7 = arith.constant 0 : index
    %c0_8 = arith.constant 0 : index
    %c0_9 = arith.constant 0 : index
    %6 = vector.load %arg4[%c0_7, %c0_8, %c0_9] : memref<1x4x2xf32, #tpu.memory_space<vmem>>, vector<1x4x1xf32>
    %7 = vector.shape_cast %6 : vector<1x4x1xf32> to vector<4x1xf32>
    %8 = vector.shape_cast %5 : vector<4x1xf32> to vector<1x4x1xf32>
    tpu.vector_store %arg4[%c0_7, %c0_8, %c0_9], %8 {strides = array<i32>} : memref<1x4x2xf32, #tpu.memory_space<vmem>>, vector<1x4x1xf32>,
    %c0_10 = arith.constant 0 : index
    %c0_11 = arith.constant 0 : index
    %c0_12 = arith.constant 0 : index
    %9 = vector.load %arg3[%c0_10, %c0_11, %c0_12] : memref<4x32x64xf32, #tpu.memory_space<vmem>>, vector<4x32x64xf32>
    "tpu.trace_start"() <{level = 10 : i32, message = "bnd,bsd->bns"}> : () -> ()
    %cst_13 = arith.constant dense<0.000000e+00> : vector<4x16x32xf32>
    %10 = tpu.matmul %0, %9, %cst_13 {dimension_numbers = #tpu.dot_dimension_numbers<[2], [2], [1], [1], [0, 0, 0, 1, 1, 1], [0], [0]>} : vector<4x16x64xf32>, vector<4x32x64xf32>, vector<4x16x32xf32> -> vector<4x16x32xf32>
    "tpu.trace_stop"() : () -> ()
    %cst_14 = arith.constant dense<0xFF800000> : vector<4x16xf32>
    %11 = vector.multi_reduction <maximumf>, %10, %cst_14 [2] : vector<4x16x32xf32> to vector<4x16xf32>
    %12 = vector.shape_cast %11 : vector<4x16xf32> to vector<4x16x1xf32>
    %cst_15 = arith.constant dense<0.000000e+00> : vector<4x1xf32>
    %13 = vector.multi_reduction <add>, %12, %cst_15 [1] : vector<4x16x1xf32> to vector<4x1xf32>
    %c0_16 = arith.constant 0 : index
    %c0_17 = arith.constant 0 : index
    %c1 = arith.constant 1 : index
    %14 = vector.load %arg4[%c0_16, %c0_17, %c1] : memref<1x4x2xf32, #tpu.memory_space<vmem>>, vector<1x4x1xf32>
    %15 = vector.shape_cast %14 : vector<1x4x1xf32> to vector<4x1xf32>
    %16 = vector.shape_cast %13 : vector<4x1xf32> to vector<1x4x1xf32>
    tpu.vector_store %arg4[%c0_16, %c0_17, %c1], %16 {strides = array<i32>} : memref<1x4x2xf32, #tpu.memory_space<vmem>>, vector<1x4x1xf32>,
    return
  }
  func.func @transform_0(%arg0: i32) -> (i32, i32, i32) {
    %c0_i32 = arith.constant 0 : i32
    %c0_i32_0 = arith.constant 0 : i32
    %c0_i32_1 = arith.constant 0 : i32
    return %arg0, %c0_i32, %c0_i32_0 : i32, i32, i32
  }
  func.func @transform_1(%arg0: i32) -> (i32, i32, i32) {
    %c0_i32 = arith.constant 0 : i32
    %c0_i32_0 = arith.constant 0 : i32
    %c0_i32_1 = arith.constant 0 : i32
    return %arg0, %c0_i32, %c0_i32_0 : i32, i32, i32
  }
  func.func @transform_2(%arg0: i32) -> (i32, i32, i32) {
    %c0_i32 = arith.constant 0 : i32
    %c0_i32_0 = arith.constant 0 : i32
    %c0_i32_1 = arith.constant 0 : i32
    return %arg0, %c0_i32, %c0_i32_0 : i32, i32, i32
  }
  func.func @transform_3(%arg0: i32) -> (i32, i32, i32) {
    %c0_i32 = arith.constant 0 : i32
    %c0_i32_0 = arith.constant 0 : i32
    %c0_i32_1 = arith.constant 0 : i32
    return %arg0, %c0_i32, %c0_i32_0 : i32, i32, i32
  }
}

</mosaic_0001>

<llo_original>
// kernel: tpu_custom_call.1
$region0: #{tpu_custom_call.1}
  #allocation0 [shape = 'u32[]', space=smem, size = 0x4, offset = 0x4, fixed_abs, tag = 'smem constant byte address 0x4 - core index']
  #allocation1 [shape = 'u32[144,128]{1,0:T(1,128)}', space=vmem, size = 0x12000, scoped, tag = 'internal scratch']
  %s0 = inlined_call_operand.hbm [shape: f32[4,16,64], index: 0, kind: input, shape index: {}]
  %s1 = inlined_call_operand.hbm [shape: f32[4,48,64], index: 1, kind: input, shape index: {}]
  %s2 = inlined_call_operand.hbm [shape: f32[4,32,64], index: 2, kind: input, shape index: {}]
  %s3 = inlined_call_operand.vmem [shape: f32[1,4,2], index: 3, kind: output, shape index: {}]
  %s4 = sld [smem:[#allocation0]]
  $region34: #{tpu_custom_call.1} parent=0
    _
  %s6 = ssub.s32 1, %s4
  %s7 = scalar_select 0, %s6, %s4
  $region1: #{tpu_custom_call.1} parent=0
    #allocation2 [shape = 'u8[32768]{0}', space=vmem, size = 0x8000, scoped, tag = 'input window, operand 0, single buffered']
    #allocation3 [shape = 's32[1]{0}', space=sflag, size = 0x4, scoped, tag = 'scoped memory for tpu_custom_call.1']
    #allocation4 [shape = 'u8[98304]{0}', space=vmem, size = 0x18000, scoped, tag = 'input window, operand 1, single buffered']
    #allocation5 [shape = 's32[1]{0}', space=sflag, size = 0x4, scoped, tag = 'scoped memory for tpu_custom_call.1']
    #allocation6 [shape = 'u8[65536]{0}', space=vmem, size = 0x10000, scoped, tag = 'input window, operand 2, single buffered']
    %8 = vsyncpa [#allocation3], 0
    %9 = vsyncpa [#allocation5], 0
    // Predicated region
    $region2: #{tpu_custom_call.1} parent=1 // pred_check
      _
    $region3: #{tpu_custom_call.1} parent=1 // pred_check_branch
      %11 = sbr.rel (0) target = $region5
    $region4: #{tpu_custom_call.1} parent=1 // pred_region
      %s13 = ssub.s32 1024, 1024
      %14 = vsyncadd [#allocation3], %s13
      %s15 = sshll.u32 [#allocation2], 4
      %s16 = int_to_ptr.vmem [resolvable:$true] %s15
      %21 = dma.hbm_to_vmem [thread:$0]  %s0, 1024, %s16, [#allocation3], 128, 128, 8
    $region5: #{tpu_custom_call.1} parent=1 // pred_fallthru
      _
    // Predicated region
    $region6: #{tpu_custom_call.1} parent=1 // pred_check
      _
    $region7: #{tpu_custom_call.1} parent=1 // pred_check_branch
      %23 = sbr.rel (0) target = $region9
    $region8: #{tpu_custom_call.1} parent=1 // pred_region
      %s25 = ssub.s32 3072, 3072
      %26 = vsyncadd [#allocation5], %s25
      %s27 = sshll.u32 [#allocation4], 4
      %s28 = int_to_ptr.vmem [resolvable:$true] %s27
      %33 = dma.hbm_to_vmem [thread:$0]  %s1, 3072, %s28, [#allocation5], 128, 128, 8
    $region9: #{tpu_custom_call.1} parent=1 // pred_fallthru
      _
    // Predicated region
    $region10: #{tpu_custom_call.1} parent=1 // pred_check
      _
    $region11: #{tpu_custom_call.1} parent=1 // pred_check_branch
      %35 = sbr.rel (0) target = $region13
    $region12: #{tpu_custom_call.1} parent=1 // pred_region
      %s37 = ssub.s32 2048, 2048
      %38 = vsyncadd [#allocation5], %s37
      %s39 = sshll.u32 [#allocation6], 4
      %s40 = int_to_ptr.vmem [resolvable:$true] %s39
      %45 = dma.hbm_to_vmem [thread:$0]  %s2, 2048, %s40, [#allocation5], 128, 128, 8
    $region13: #{tpu_custom_call.1} parent=1 // pred_fallthru
      _
    // Predicated region
    $region14: #{tpu_custom_call.1} parent=1 // pred_check
      _
    $region15: #{tpu_custom_call.1} parent=1 // pred_check_branch
      %47 = sbr.rel (0) target = $region17
    $region16: #{tpu_custom_call.1} parent=1 // pred_region
      %48 = dma.done [#allocation3], 1024
    $region17: #{tpu_custom_call.1} parent=1 // pred_fallthru
      _
    // Predicated region
    $region18: #{tpu_custom_call.1} parent=1 // pred_check
      _
    $region19: #{tpu_custom_call.1} parent=1 // pred_check_branch
      %50 = sbr.rel (0) target = $region21
    $region20: #{tpu_custom_call.1} parent=1 // pred_region
      %51 = dma.done [#allocation5], 3072
    $region21: #{tpu_custom_call.1} parent=1 // pred_fallthru
      _
    // Predicated region
    $region22: #{tpu_custom_call.1} parent=1 // pred_check
      _
    $region23: #{tpu_custom_call.1} parent=1 // pred_check_branch
      %53 = sbr.rel (0) target = $region25
    $region24: #{tpu_custom_call.1} parent=1 // pred_region
      %54 = dma.done [#allocation5], 2048
    $region25: #{tpu_custom_call.1} parent=1 // pred_fallthru
      _
    %v55 = vld [vmem:[#allocation2] sm:$0xff]
    %v56 = vld [vmem:[#allocation2 + $0x8] sm:$0xff]
    %v57 = vld [vmem:[#allocation2 + $0x10] sm:$0xff]
    %v58 = vld [vmem:[#allocation2 + $0x18] sm:$0xff]
    %v59 = vld [vmem:[#allocation2 + $0x20] sm:$0xff]
    %v60 = vld [vmem:[#allocation2 + $0x28] sm:$0xff]
    %v61 = vld [vmem:[#allocation2 + $0x30] sm:$0xff]
    %v62 = vld [vmem:[#allocation2 + $0x38] sm:$0xff]
    %v63 = vld [vmem:[#allocation4] sm:$0xff]
    %v64 = vld [vmem:[#allocation4 + $0x8] sm:$0xff]
    %v65 = vld [vmem:[#allocation4 + $0x10] sm:$0xff]
    %v66 = vld [vmem:[#allocation4 + $0x18] sm:$0xff]
    %v67 = vld [vmem:[#allocation4 + $0x20] sm:$0xff]
    %v68 = vld [vmem:[#allocation4 + $0x28] sm:$0xff]
    %v69 = vld [vmem:[#allocation4 + $0x30] sm:$0xff]
    %v70 = vld [vmem:[#allocation4 + $0x38] sm:$0xff]
    %v71 = vld [vmem:[#allocation4 + $0x40] sm:$0xff]
    %v72 = vld [vmem:[#allocation4 + $0x48] sm:$0xff]
    %v73 = vld [vmem:[#allocation4 + $0x50] sm:$0xff]
    %v74 = vld [vmem:[#allocation4 + $0x58] sm:$0xff]
    %v75 = vld [vmem:[#allocation4 + $0x60] sm:$0xff]
    %v76 = vld [vmem:[#allocation4 + $0x68] sm:$0xff]
    %v77 = vld [vmem:[#allocation4 + $0x70] sm:$0xff]
    %v78 = vld [vmem:[#allocation4 + $0x78] sm:$0xff]
    %v79 = vld [vmem:[#allocation4 + $0x80] sm:$0xff]
    %v80 = vld [vmem:[#allocation4 + $0x88] sm:$0xff]
    %v81 = vld [vmem:[#allocation4 + $0x90] sm:$0xff]
    %v82 = vld [vmem:[#allocation4 + $0x98] sm:$0xff]
    %v83 = vld [vmem:[#allocation4 + $0xa0] sm:$0xff]
    %v84 = vld [vmem:[#allocation4 + $0xa8] sm:$0xff]
    %v85 = vld [vmem:[#allocation4 + $0xb0] sm:$0xff]
    %v86 = vld [vmem:[#allocation4 + $0xb8] sm:$0xff]
    %vm87 = vcmask 523264
    %v89 = vsel %vm87, %v55, 0
    %v92 = vsel %vm87, %v56, 0
    %v95 = vsel %vm87, %v63, 0
    %v98 = vsel %vm87, %v64, 0
    %v101 = vsel %vm87, %v65, 0
    %v104 = vsel %vm87, %v66, 0
    %v107 = vsel %vm87, %v67, 0
    %v110 = vsel %vm87, %v68, 0
    %112 = vmatprep.subr.mxu0 0.0
    %113 = vmatpush1.xpose.msra.mxu0 0.0
    %114 = vmatprep.subr.mxu0 0.0
    %115 = vmatpush1.xpose.msra.mxu0 0.0
    %116 = vmatprep.subr.mxu0 0.0
    %117 = vmatpush1.xpose.msra.mxu0 0.0
    %118 = vmatprep.subr.mxu0 0.0
    %119 = vmatpush1.xpose.msra.mxu0 0.0
    %120 = vmatprep.subr.mxu0 0.0
    %121 = vmatpush1.xpose.msra.mxu0 0.0
    %122 = vmatprep.subr.mxu0 0.0
    %123 = vmatpush1.xpose.msra.mxu0 0.0
    %124 = vmatprep.subr.mxu0 0.0
    %125 = vmatpush1.xpose.msra.mxu0 0.0
    %126 = vmatprep.subr.mxu0 0.0
    %127 = vmatpush1.xpose.msra.mxu0 0.0
    %128 = vmatprep.subr.mxu0 0.0
    %129 = vmatpush1.xpose.msra.mxu0 0.0
    %130 = vmatprep.subr.mxu0 0.0
    %131 = vmatpush1.xpose.msra.mxu0 0.0
    %132 = vmatprep.subr.mxu0 0.0
    %133 = vmatpush1.xpose.msra.mxu0 %v110
    %134 = vmatprep.subr.mxu0 0.0
    %135 = vmatpush1.xpose.msra.mxu0 %v107
    %136 = vmatprep.subr.mxu0 0.0
    %137 = vmatpush1.xpose.msra.mxu0 %v104
    %138 = vmatprep.subr.mxu0 0.0
    %139 = vmatpush1.xpose.msra.mxu0 %v101
    %140 = vmatprep.subr.mxu0 0.0
    %141 = vmatpush1.xpose.msra.mxu0 %v98
    %142 = vmatprep.subr.mxu0 0.0
    %143 = vmatpush1.xpose.msra.mxu0 %v95
    %144 = vmatprep.subr.mxu0 0.0
    %145 = vmatpush2.xpose.msra.mxu0 0.0
    %146 = vmatprep.subr.mxu0 0.0
    %147 = vmatpush2.xpose.msra.mxu0 0.0
    %148 = vmatprep.subr.mxu0 0.0
    %149 = vmatpush2.xpose.msra.mxu0 0.0
    %150 = vmatprep.subr.mxu0 0.0
    %151 = vmatpush2.xpose.msra.mxu0 0.0
    %152 = vmatprep.subr.mxu0 0.0
    %153 = vmatpush2.xpose.msra.mxu0 0.0
    %154 = vmatprep.subr.mxu0 0.0
    %155 = vmatpush2.xpose.msra.mxu0 0.0
    %156 = vmatprep.subr.mxu0 0.0
    %157 = vmatpush2.xpose.msra.mxu0 0.0
    %158 = vmatprep.subr.mxu0 0.0
    %159 = vmatpush2.xpose.msra.mxu0 0.0
    %160 = vmatprep.subr.mxu0 0.0
    %161 = vmatpush2.xpose.msra.mxu0 0.0
    %162 = vmatprep.subr.mxu0 0.0
    %163 = vmatpush2.xpose.msra.mxu0 0.0
    %164 = vmatprep.subr.mxu0 0.0
    %165 = vmatpush2.xpose.msra.mxu0 0.0
    %166 = vmatprep.subr.mxu0 0.0
    %167 = vmatpush2.xpose.msra.mxu0 0.0
    %168 = vmatprep.subr.mxu0 0.0
    %169 = vmatpush2.xpose.msra.mxu0 0.0
    %170 = vmatprep.subr.mxu0 0.0
    %171 = vmatpush2.xpose.msra.mxu0 0.0
    %172 = vmatprep.subr.mxu0 0.0
    %173 = vmatpush2.xpose.msra.mxu0 0.0
    %174 = vmatprep.subr.mxu0 0.0
    %175 = vmatpush2.xpose.msra.mxu0 0.0
    %176 = vmatprep.mubr.f32.mxu0 0.0
    %177 = vmatmul.mubr.f32.gmra.mxu0 %v89
    %v178 = vpop.f32.mrf.mxu0
    %v179 = vadd.f32 0.0, %v178
    %v180 = vpop.f32.mrf.mxu0
    %181 = vmatprep.mubr.f32.mxu0 0.0
    %182 = vmatmul.mubr.f32.gmra.mxu0 %v92
    %v183 = vpop.f32.mrf.mxu0
    %v184 = vadd.f32 0.0, %v183
    %v185 = vpop.f32.mrf.mxu0
    %186 = vdwg.mxu0
    %v188 = vsel %vm87, %v57, 0
    %v191 = vsel %vm87, %v58, 0
    %v194 = vsel %vm87, %v69, 0
    %v197 = vsel %vm87, %v70, 0
    %v200 = vsel %vm87, %v71, 0
    %v203 = vsel %vm87, %v72, 0
    %v206 = vsel %vm87, %v73, 0
    %v209 = vsel %vm87, %v74, 0
    %211 = vmatprep.subr.mxu0 0.0
    %212 = vmatpush1.xpose.msra.mxu0 0.0
    %213 = vmatprep.subr.mxu0 0.0
    %214 = vmatpush1.xpose.msra.mxu0 0.0
    %215 = vmatprep.subr.mxu0 0.0
    %216 = vmatpush1.xpose.msra.mxu0 0.0
    %217 = vmatprep.subr.mxu0 0.0
    %218 = vmatpush1.xpose.msra.mxu0 0.0
    %219 = vmatprep.subr.mxu0 0.0
    %220 = vmatpush1.xpose.msra.mxu0 0.0
    %221 = vmatprep.subr.mxu0 0.0
    %222 = vmatpush1.xpose.msra.mxu0 0.0
    %223 = vmatprep.subr.mxu0 0.0
    %224 = vmatpush1.xpose.msra.mxu0 0.0
    %225 = vmatprep.subr.mxu0 0.0
    %226 = vmatpush1.xpose.msra.mxu0 0.0
    %227 = vmatprep.subr.mxu0 0.0
    %228 = vmatpush1.xpose.msra.mxu0 0.0
    %229 = vmatprep.subr.mxu0 0.0
    %230 = vmatpush1.xpose.msra.mxu0 0.0
    %231 = vmatprep.subr.mxu0 0.0
    %232 = vmatpush1.xpose.msra.mxu0 %v209
    %233 = vmatprep.subr.mxu0 0.0
    %234 = vmatpush1.xpose.msra.mxu0 %v206
    %235 = vmatprep.subr.mxu0 0.0
    %236 = vmatpush1.xpose.msra.mxu0 %v203
    %237 = vmatprep.subr.mxu0 0.0
    %238 = vmatpush1.xpose.msra.mxu0 %v200
    %239 = vmatprep.subr.mxu0 0.0
    %240 = vmatpush1.xpose.msra.mxu0 %v197
    %241 = vmatprep.subr.mxu0 0.0
    %242 = vmatpush1.xpose.msra.mxu0 %v194
    %243 = vmatprep.subr.mxu0 0.0
    %244 = vmatpush2.xpose.msra.mxu0 0.0
    %245 = vmatprep.subr.mxu0 0.0
    %246 = vmatpush2.xpose.msra.mxu0 0.0
    %247 = vmatprep.subr.mxu0 0.0
    %248 = vmatpush2.xpose.msra.mxu0 0.0
    %249 = vmatprep.subr.mxu0 0.0
    %250 = vmatpush2.xpose.msra.mxu0 0.0
    %251 = vmatprep.subr.mxu0 0.0
    %252 = vmatpush2.xpose.msra.mxu0 0.0
    %253 = vmatprep.subr.mxu0 0.0
    %254 = vmatpush2.xpose.msra.mxu0 0.0
    %255 = vmatprep.subr.mxu0 0.0
    %256 = vmatpush2.xpose.msra.mxu0 0.0
    %257 = vmatprep.subr.mxu0 0.0
    %258 = vmatpush2.xpose.msra.mxu0 0.0
    %259 = vmatprep.subr.mxu0 0.0
    %260 = vmatpush2.xpose.msra.mxu0 0.0
    %261 = vmatprep.subr.mxu0 0.0
    %262 = vmatpush2.xpose.msra.mxu0 0.0
    %263 = vmatprep.subr.mxu0 0.0
    %264 = vmatpush2.xpose.msra.mxu0 0.0
    %265 = vmatprep.subr.mxu0 0.0
    %266 = vmatpush2.xpose.msra.mxu0 0.0
    %267 = vmatprep.subr.mxu0 0.0
    %268 = vmatpush2.xpose.msra.mxu0 0.0
    %269 = vmatprep.subr.mxu0 0.0
    %270 = vmatpush2.xpose.msra.mxu0 0.0
    %271 = vmatprep.subr.mxu0 0.0
    %272 = vmatpush2.xpose.msra.mxu0 0.0
    %273 = vmatprep.subr.mxu0 0.0
    %274 = vmatpush2.xpose.msra.mxu0 0.0
    %275 = vmatprep.mubr.f32.mxu0 0.0
    %276 = vmatmul.mubr.f32.gmra.mxu0 %v188
    %v277 = vpop.f32.mrf.mxu0
    %v278 = vadd.f32 0.0, %v277
    %v279 = vpop.f32.mrf.mxu0
    %280 = vmatprep.mubr.f32.mxu0 0.0
    %281 = vmatmul.mubr.f32.gmra.mxu0 %v191
    %v282 = vpop.f32.mrf.mxu0
    %v283 = vadd.f32 0.0, %v282
    %v284 = vpop.f32.mrf.mxu0
    %285 = vdwg.mxu0
    %v287 = vsel %vm87, %v59, 0
    %v290 = vsel %vm87, %v60, 0
    %v293 = vsel %vm87, %v75, 0
    %v296 = vsel %vm87, %v76, 0
    %v299 = vsel %vm87, %v77, 0
    %v302 = vsel %vm87, %v78, 0
    %v305 = vsel %vm87, %v79, 0
    %v308 = vsel %vm87, %v80, 0
    %310 = vmatprep.subr.mxu0 0.0
    %311 = vmatpush1.xpose.msra.mxu0 0.0
    %312 = vmatprep.subr.mxu0 0.0
    %313 = vmatpush1.xpose.msra.mxu0 0.0
    %314 = vmatprep.subr.mxu0 0.0
    %315 = vmatpush1.xpose.msra.mxu0 0.0
    %316 = vmatprep.subr.mxu0 0.0
    %317 = vmatpush1.xpose.msra.mxu0 0.0
    %318 = vmatprep.subr.mxu0 0.0
    %319 = vmatpush1.xpose.msra.mxu0 0.0
    %320 = vmatprep.subr.mxu0 0.0
    %321 = vmatpush1.xpose.msra.mxu0 0.0
    %322 = vmatprep.subr.mxu0 0.0
    %323 = vmatpush1.xpose.msra.mxu0 0.0
    %324 = vmatprep.subr.mxu0 0.0
    %325 = vmatpush1.xpose.msra.mxu0 0.0
    %326 = vmatprep.subr.mxu0 0.0
    %327 = vmatpush1.xpose.msra.mxu0 0.0
    %328 = vmatprep.subr.mxu0 0.0
    %329 = vmatpush1.xpose.msra.mxu0 0.0
    %330 = vmatprep.subr.mxu0 0.0
    %331 = vmatpush1.xpose.msra.mxu0 %v308
    %332 = vmatprep.subr.mxu0 0.0
    %333 = vmatpush1.xpose.msra.mxu0 %v305
    %334 = vmatprep.subr.mxu0 0.0
    %335 = vmatpush1.xpose.msra.mxu0 %v302
    %336 = vmatprep.subr.mxu0 0.0
    %337 = vmatpush1.xpose.msra.mxu0 %v299
    %338 = vmatprep.subr.mxu0 0.0
    %339 = vmatpush1.xpose.msra.mxu0 %v296
    %340 = vmatprep.subr.mxu0 0.0
    %341 = vmatpush1.xpose.msra.mxu0 %v293
    %342 = vmatprep.subr.mxu0 0.0
    %343 = vmatpush2.xpose.msra.mxu0 0.0
    %344 = vmatprep.subr.mxu0 0.0
    %345 = vmatpush2.xpose.msra.mxu0 0.0
    %346 = vmatprep.subr.mxu0 0.0
    %347 = vmatpush2.xpose.msra.mxu0 0.0
    %348 = vmatprep.subr.mxu0 0.0
    %349 = vmatpush2.xpose.msra.mxu0 0.0
    %350 = vmatprep.subr.mxu0 0.0
    %351 = vmatpush2.xpose.msra.mxu0 0.0
    %352 = vmatprep.subr.mxu0 0.0
    %353 = vmatpush2.xpose.msra.mxu0 0.0
    %354 = vmatprep.subr.mxu0 0.0
    %355 = vmatpush2.xpose.msra.mxu0 0.0
    %356 = vmatprep.subr.mxu0 0.0
    %357 = vmatpush2.xpose.msra.mxu0 0.0
    %358 = vmatprep.subr.mxu0 0.0
    %359 = vmatpush2.xpose.msra.mxu0 0.0
    %360 = vmatprep.subr.mxu0 0.0
    %361 = vmatpush2.xpose.msra.mxu0 0.0
    %362 = vmatprep.subr.mxu0 0.0
    %363 = vmatpush2.xpose.msra.mxu0 0.0
    %364 = vmatprep.subr.mxu0 0.0
    %365 = vmatpush2.xpose.msra.mxu0 0.0
    %366 = vmatprep.subr.mxu0 0.0
    %367 = vmatpush2.xpose.msra.mxu0 0.0
    %368 = vmatprep.subr.mxu0 0.0
    %369 = vmatpush2.xpose.msra.mxu0 0.0
    %370 = vmatprep.subr.mxu0 0.0
    %371 = vmatpush2.xpose.msra.mxu0 0.0
    %372 = vmatprep.subr.mxu0 0.0
    %373 = vmatpush2.xpose.msra.mxu0 0.0
    %374 = vmatprep.mubr.f32.mxu0 0.0
    %375 = vmatmul.mubr.f32.gmra.mxu0 %v287
    %v376 = vpop.f32.mrf.mxu0
    %v377 = vadd.f32 0.0, %v376
    %v378 = vpop.f32.mrf.mxu0
    %379 = vmatprep.mubr.f32.mxu0 0.0
    %380 = vmatmul.mubr.f32.gmra.mxu0 %v290
    %v381 = vpop.f32.mrf.mxu0
    %v382 = vadd.f32 0.0, %v381
    %v383 = vpop.f32.mrf.mxu0
    %384 = vdwg.mxu0
    %v386 = vsel %vm87, %v61, 0
    %v389 = vsel %vm87, %v62, 0
    %v392 = vsel %vm87, %v81, 0
    %v395 = vsel %vm87, %v82, 0
    %v398 = vsel %vm87, %v83, 0
    %v401 = vsel %vm87, %v84, 0
    %v404 = vsel %vm87, %v85, 0
    %v407 = vsel %vm87, %v86, 0
    %409 = vmatprep.subr.mxu0 0.0
    %410 = vmatpush1.xpose.msra.mxu0 0.0
    %411 = vmatprep.subr.mxu0 0.0
    %412 = vmatpush1.xpose.msra.mxu0 0.0
    %413 = vmatprep.subr.mxu0 0.0
    %414 = vmatpush1.xpose.msra.mxu0 0.0
    %415 = vmatprep.subr.mxu0 0.0
    %416 = vmatpush1.xpose.msra.mxu0 0.0
    %417 = vmatprep.subr.mxu0 0.0
    %418 = vmatpush1.xpose.msra.mxu0 0.0
    %419 = vmatprep.subr.mxu0 0.0
    %420 = vmatpush1.xpose.msra.mxu0 0.0
    %421 = vmatprep.subr.mxu0 0.0
    %422 = vmatpush1.xpose.msra.mxu0 0.0
    %423 = vmatprep.subr.mxu0 0.0
    %424 = vmatpush1.xpose.msra.mxu0 0.0
    %425 = vmatprep.subr.mxu0 0.0
    %426 = vmatpush1.xpose.msra.mxu0 0.0
    %427 = vmatprep.subr.mxu0 0.0
    %428 = vmatpush1.xpose.msra.mxu0 0.0
    %429 = vmatprep.subr.mxu0 0.0
    %430 = vmatpush1.xpose.msra.mxu0 %v407
    %431 = vmatprep.subr.mxu0 0.0
    %432 = vmatpush1.xpose.msra.mxu0 %v404
    %433 = vmatprep.subr.mxu0 0.0
    %434 = vmatpush1.xpose.msra.mxu0 %v401
    %435 = vmatprep.subr.mxu0 0.0
    %436 = vmatpush1.xpose.msra.mxu0 %v398
    %437 = vmatprep.subr.mxu0 0.0
    %438 = vmatpush1.xpose.msra.mxu0 %v395
    %439 = vmatprep.subr.mxu0 0.0
    %440 = vmatpush1.xpose.msra.mxu0 %v392
    %441 = vmatprep.subr.mxu0 0.0
    %442 = vmatpush2.xpose.msra.mxu0 0.0
    %443 = vmatprep.subr.mxu0 0.0
    %444 = vmatpush2.xpose.msra.mxu0 0.0
    %445 = vmatprep.subr.mxu0 0.0
    %446 = vmatpush2.xpose.msra.mxu0 0.0
    %447 = vmatprep.subr.mxu0 0.0
    %448 = vmatpush2.xpose.msra.mxu0 0.0
    %449 = vmatprep.subr.mxu0 0.0
    %450 = vmatpush2.xpose.msra.mxu0 0.0
    %451 = vmatprep.subr.mxu0 0.0
    %452 = vmatpush2.xpose.msra.mxu0 0.0
    %453 = vmatprep.subr.mxu0 0.0
    %454 = vmatpush2.xpose.msra.mxu0 0.0
    %455 = vmatprep.subr.mxu0 0.0
    %456 = vmatpush2.xpose.msra.mxu0 0.0
    %457 = vmatprep.subr.mxu0 0.0
    %458 = vmatpush2.xpose.msra.mxu0 0.0
    %459 = vmatprep.subr.mxu0 0.0
    %460 = vmatpush2.xpose.msra.mxu0 0.0
    %461 = vmatprep.subr.mxu0 0.0
    %462 = vmatpush2.xpose.msra.mxu0 0.0
    %463 = vmatprep.subr.mxu0 0.0
    %464 = vmatpush2.xpose.msra.mxu0 0.0
    %465 = vmatprep.subr.mxu0 0.0
    %466 = vmatpush2.xpose.msra.mxu0 0.0
    %467 = vmatprep.subr.mxu0 0.0
    %468 = vmatpush2.xpose.msra.mxu0 0.0
    %469 = vmatprep.subr.mxu0 0.0
    %470 = vmatpush2.xpose.msra.mxu0 0.0
    %471 = vmatprep.subr.mxu0 0.0
    %472 = vmatpush2.xpose.msra.mxu0 0.0
    %473 = vmatprep.mubr.f32.mxu0 0.0
    %474 = vmatmul.mubr.f32.gmra.mxu0 %v386
    %v475 = vpop.f32.mrf.mxu0
    %v476 = vadd.f32 0.0, %v475
    %v477 = vpop.f32.mrf.mxu0
    %478 = vmatprep.mubr.f32.mxu0 0.0
    %479 = vmatmul.mubr.f32.gmra.mxu0 %v389
    %v480 = vpop.f32.mrf.mxu0
    %v481 = vadd.f32 0.0, %v480
    %v482 = vpop.f32.mrf.mxu0
    %483 = vdwg.mxu0
    %vm484 = vcmask 392192
    %v485 = vsel %vm484, %v179, -inf
    %486 = vmax.xlane.f32.xlu0 %v485
    %v487 = vpop.xlane.xlu0 %486
    %v488 = vsel %vm484, %v184, -inf
    %489 = vmax.xlane.f32.xlu0 %v488
    %v490 = vpop.xlane.xlu0 %489
    %v491 = vsel %vm484, %v278, -inf
    %492 = vmax.xlane.f32.xlu0 %v491
    %v493 = vpop.xlane.xlu0 %492
    %v494 = vsel %vm484, %v283, -inf
    %495 = vmax.xlane.f32.xlu0 %v494
    %v496 = vpop.xlane.xlu0 %495
    %v497 = vsel %vm484, %v377, -inf
    %498 = vmax.xlane.f32.xlu0 %v497
    %v499 = vpop.xlane.xlu0 %498
    %v500 = vsel %vm484, %v382, -inf
    %501 = vmax.xlane.f32.xlu0 %v500
    %v502 = vpop.xlane.xlu0 %501
    %v503 = vsel %vm484, %v476, -inf
    %504 = vmax.xlane.f32.xlu0 %v503
    %v505 = vpop.xlane.xlu0 %504
    %v506 = vsel %vm484, %v481, -inf
    %507 = vmax.xlane.f32.xlu0 %v506
    %v508 = vpop.xlane.xlu0 %507
    %v509 = vadd.f32 %v487, %v490
    %v510 = vrot.slane %v509, 4
    %v511 = vadd.f32 %v509, %v510
    %v512 = vrot.slane %v511, 2
    %v513 = vadd.f32 %v511, %v512
    %v514 = vrot.slane %v513, 1
    %v515 = vadd.f32 %v513, %v514
    %v516 = vadd.f32 %v493, %v496
    %v517 = vrot.slane %v516, 4
    %v518 = vadd.f32 %v516, %v517
    %v519 = vrot.slane %v518, 2
    %v520 = vadd.f32 %v518, %v519
    %v521 = vrot.slane %v520, 1
    %v522 = vadd.f32 %v520, %v521
    %v523 = vadd.f32 %v499, %v502
    %v524 = vrot.slane %v523, 4
    %v525 = vadd.f32 %v523, %v524
    %v526 = vrot.slane %v525, 2
    %v527 = vadd.f32 %v525, %v526
    %v528 = vrot.slane %v527, 1
    %v529 = vadd.f32 %v527, %v528
    %v530 = vadd.f32 %v505, %v508
    %v531 = vrot.slane %v530, 4
    %v532 = vadd.f32 %v530, %v531
    %v533 = vrot.slane %v532, 2
    %v534 = vadd.f32 %v532, %v533
    %v535 = vrot.slane %v534, 1
    %v536 = vadd.f32 %v534, %v535
    %vm541 = vcmask 1041409
    %v542 = vsel %vm541, %v522, %v515
    %vm543 = vcmask 1042434
    %v544 = vsel %vm543, %v529, %v542
    %vm545 = vcmask 1043459
    %v546 = vsel %vm545, %v536, %v544
    %vm548 = vcmask 3072
    %549 = vst.msk [vmem:[%s3] sm:$0xf] %vm548, %v546
    %v550 = vld [vmem:[#allocation6] sm:$0xff]
    %v551 = vld [vmem:[#allocation6 + $0x8] sm:$0xff]
    %v552 = vld [vmem:[#allocation6 + $0x10] sm:$0xff]
    %v553 = vld [vmem:[#allocation6 + $0x18] sm:$0xff]
    %v554 = vld [vmem:[#allocation6 + $0x20] sm:$0xff]
    %v555 = vld [vmem:[#allocation6 + $0x28] sm:$0xff]
    %v556 = vld [vmem:[#allocation6 + $0x30] sm:$0xff]
    %v557 = vld [vmem:[#allocation6 + $0x38] sm:$0xff]
    %v558 = vld [vmem:[#allocation6 + $0x40] sm:$0xff]
    %v559 = vld [vmem:[#allocation6 + $0x48] sm:$0xff]
    %v560 = vld [vmem:[#allocation6 + $0x50] sm:$0xff]
    %v561 = vld [vmem:[#allocation6 + $0x58] sm:$0xff]
    %v562 = vld [vmem:[#allocation6 + $0x60] sm:$0xff]
    %v563 = vld [vmem:[#allocation6 + $0x68] sm:$0xff]
    %v564 = vld [vmem:[#allocation6 + $0x70] sm:$0xff]
    %v565 = vld [vmem:[#allocation6 + $0x78] sm:$0xff]
    %v567 = vsel %vm87, %v550, 0
    %v570 = vsel %vm87, %v551, 0
    %v573 = vsel %vm87, %v552, 0
    %v576 = vsel %vm87, %v553, 0
    %578 = vmatprep.subr.mxu0 0.0
    %579 = vmatpush1.xpose.msra.mxu0 0.0
    %580 = vmatprep.subr.mxu0 0.0
    %581 = vmatpush1.xpose.msra.mxu0 0.0
    %582 = vmatprep.subr.mxu0 0.0
    %583 = vmatpush1.xpose.msra.mxu0 0.0
    %584 = vmatprep.subr.mxu0 0.0
    %585 = vmatpush1.xpose.msra.mxu0 0.0
    %586 = vmatprep.subr.mxu0 0.0
    %587 = vmatpush1.xpose.msra.mxu0 0.0
    %588 = vmatprep.subr.mxu0 0.0
    %589 = vmatpush1.xpose.msra.mxu0 0.0
    %590 = vmatprep.subr.mxu0 0.0
    %591 = vmatpush1.xpose.msra.mxu0 0.0
    %592 = vmatprep.subr.mxu0 0.0
    %593 = vmatpush1.xpose.msra.mxu0 0.0
    %594 = vmatprep.subr.mxu0 0.0
    %595 = vmatpush1.xpose.msra.mxu0 0.0
    %596 = vmatprep.subr.mxu0 0.0
    %597 = vmatpush1.xpose.msra.mxu0 0.0
    %598 = vmatprep.subr.mxu0 0.0
    %599 = vmatpush1.xpose.msra.mxu0 0.0
    %600 = vmatprep.subr.mxu0 0.0
    %601 = vmatpush1.xpose.msra.mxu0 0.0
    %602 = vmatprep.subr.mxu0 0.0
    %603 = vmatpush1.xpose.msra.mxu0 %v576
    %604 = vmatprep.subr.mxu0 0.0
    %605 = vmatpush1.xpose.msra.mxu0 %v573
    %606 = vmatprep.subr.mxu0 0.0
    %607 = vmatpush1.xpose.msra.mxu0 %v570
    %608 = vmatprep.subr.mxu0 0.0
    %609 = vmatpush1.xpose.msra.mxu0 %v567
    %610 = vmatprep.subr.mxu0 0.0
    %611 = vmatpush2.xpose.msra.mxu0 0.0
    %612 = vmatprep.subr.mxu0 0.0
    %613 = vmatpush2.xpose.msra.mxu0 0.0
    %614 = vmatprep.subr.mxu0 0.0
    %615 = vmatpush2.xpose.msra.mxu0 0.0
    %616 = vmatprep.subr.mxu0 0.0
    %617 = vmatpush2.xpose.msra.mxu0 0.0
    %618 = vmatprep.subr.mxu0 0.0
    %619 = vmatpush2.xpose.msra.mxu0 0.0
    %620 = vmatprep.subr.mxu0 0.0
    %621 = vmatpush2.xpose.msra.mxu0 0.0
    %622 = vmatprep.subr.mxu0 0.0
    %623 = vmatpush2.xpose.msra.mxu0 0.0
    %624 = vmatprep.subr.mxu0 0.0
    %625 = vmatpush2.xpose.msra.mxu0 0.0
    %626 = vmatprep.subr.mxu0 0.0
    %627 = vmatpush2.xpose.msra.mxu0 0.0
    %628 = vmatprep.subr.mxu0 0.0
    %629 = vmatpush2.xpose.msra.mxu0 0.0
    %630 = vmatprep.subr.mxu0 0.0
    %631 = vmatpush2.xpose.msra.mxu0 0.0
    %632 = vmatprep.subr.mxu0 0.0
    %633 = vmatpush2.xpose.msra.mxu0 0.0
    %634 = vmatprep.subr.mxu0 0.0
    %635 = vmatpush2.xpose.msra.mxu0 0.0
    %636 = vmatprep.subr.mxu0 0.0
    %637 = vmatpush2.xpose.msra.mxu0 0.0
    %638 = vmatprep.subr.mxu0 0.0
    %639 = vmatpush2.xpose.msra.mxu0 0.0
    %640 = vmatprep.subr.mxu0 0.0
    %641 = vmatpush2.xpose.msra.mxu0 0.0
    %642 = vmatprep.mubr.f32.mxu0 0.0
    %643 = vmatmul.mubr.f32.gmra.mxu0 %v89
    %v644 = vpop.f32.mrf.mxu0
    %v645 = vadd.f32 0.0, %v644
    %v646 = vpop.f32.mrf.mxu0
    %647 = vmatprep.mubr.f32.mxu0 0.0
    %648 = vmatmul.mubr.f32.gmra.mxu0 %v92
    %v649 = vpop.f32.mrf.mxu0
    %v650 = vadd.f32 0.0, %v649
    %v651 = vpop.f32.mrf.mxu0
    %652 = vdwg.mxu0
    %v654 = vsel %vm87, %v554, 0
    %v657 = vsel %vm87, %v555, 0
    %v660 = vsel %vm87, %v556, 0
    %v663 = vsel %vm87, %v557, 0
    %665 = vmatprep.subr.mxu0 0.0
    %666 = vmatpush1.xpose.msra.mxu0 0.0
    %667 = vmatprep.subr.mxu0 0.0
    %668 = vmatpush1.xpose.msra.mxu0 0.0
    %669 = vmatprep.subr.mxu0 0.0
    %670 = vmatpush1.xpose.msra.mxu0 0.0
    %671 = vmatprep.subr.mxu0 0.0
    %672 = vmatpush1.xpose.msra.mxu0 0.0
    %673 = vmatprep.subr.mxu0 0.0
    %674 = vmatpush1.xpose.msra.mxu0 0.0
    %675 = vmatprep.subr.mxu0 0.0
    %676 = vmatpush1.xpose.msra.mxu0 0.0
    %677 = vmatprep.subr.mxu0 0.0
    %678 = vmatpush1.xpose.msra.mxu0 0.0
    %679 = vmatprep.subr.mxu0 0.0
    %680 = vmatpush1.xpose.msra.mxu0 0.0
    %681 = vmatprep.subr.mxu0 0.0
    %682 = vmatpush1.xpose.msra.mxu0 0.0
    %683 = vmatprep.subr.mxu0 0.0
    %684 = vmatpush1.xpose.msra.mxu0 0.0
    %685 = vmatprep.subr.mxu0 0.0
    %686 = vmatpush1.xpose.msra.mxu0 0.0
    %687 = vmatprep.subr.mxu0 0.0
    %688 = vmatpush1.xpose.msra.mxu0 0.0
    %689 = vmatprep.subr.mxu0 0.0
    %690 = vmatpush1.xpose.msra.mxu0 %v663
    %691 = vmatprep.subr.mxu0 0.0
    %692 = vmatpush1.xpose.msra.mxu0 %v660
    %693 = vmatprep.subr.mxu0 0.0
    %694 = vmatpush1.xpose.msra.mxu0 %v657
    %695 = vmatprep.subr.mxu0 0.0
    %696 = vmatpush1.xpose.msra.mxu0 %v654
    %697 = vmatprep.subr.mxu0 0.0
    %698 = vmatpush2.xpose.msra.mxu0 0.0
    %699 = vmatprep.subr.mxu0 0.0
    %700 = vmatpush2.xpose.msra.mxu0 0.0
    %701 = vmatprep.subr.mxu0 0.0
    %702 = vmatpush2.xpose.msra.mxu0 0.0
    %703 = vmatprep.subr.mxu0 0.0
    %704 = vmatpush2.xpose.msra.mxu0 0.0
    %705 = vmatprep.subr.mxu0 0.0
    %706 = vmatpush2.xpose.msra.mxu0 0.0
    %707 = vmatprep.subr.mxu0 0.0
    %708 = vmatpush2.xpose.msra.mxu0 0.0
    %709 = vmatprep.subr.mxu0 0.0
    %710 = vmatpush2.xpose.msra.mxu0 0.0
    %711 = vmatprep.subr.mxu0 0.0
    %712 = vmatpush2.xpose.msra.mxu0 0.0
    %713 = vmatprep.subr.mxu0 0.0
    %714 = vmatpush2.xpose.msra.mxu0 0.0
    %715 = vmatprep.subr.mxu0 0.0
    %716 = vmatpush2.xpose.msra.mxu0 0.0
    %717 = vmatprep.subr.mxu0 0.0
    %718 = vmatpush2.xpose.msra.mxu0 0.0
    %719 = vmatprep.subr.mxu0 0.0
    %720 = vmatpush2.xpose.msra.mxu0 0.0
    %721 = vmatprep.subr.mxu0 0.0
    %722 = vmatpush2.xpose.msra.mxu0 0.0
    %723 = vmatprep.subr.mxu0 0.0
    %724 = vmatpush2.xpose.msra.mxu0 0.0
    %725 = vmatprep.subr.mxu0 0.0
    %726 = vmatpush2.xpose.msra.mxu0 0.0
    %727 = vmatprep.subr.mxu0 0.0
    %728 = vmatpush2.xpose.msra.mxu0 0.0
    %729 = vmatprep.mubr.f32.mxu0 0.0
    %730 = vmatmul.mubr.f32.gmra.mxu0 %v188
    %v731 = vpop.f32.mrf.mxu0
    %v732 = vadd.f32 0.0, %v731
    %v733 = vpop.f32.mrf.mxu0
    %734 = vmatprep.mubr.f32.mxu0 0.0
    %735 = vmatmul.mubr.f32.gmra.mxu0 %v191
    %v736 = vpop.f32.mrf.mxu0
    %v737 = vadd.f32 0.0, %v736
    %v738 = vpop.f32.mrf.mxu0
    %739 = vdwg.mxu0
    %v741 = vsel %vm87, %v558, 0
    %v744 = vsel %vm87, %v559, 0
    %v747 = vsel %vm87, %v560, 0
    %v750 = vsel %vm87, %v561, 0
    %752 = vmatprep.subr.mxu0 0.0
    %753 = vmatpush1.xpose.msra.mxu0 0.0
    %754 = vmatprep.subr.mxu0 0.0
    %755 = vmatpush1.xpose.msra.mxu0 0.0
    %756 = vmatprep.subr.mxu0 0.0
    %757 = vmatpush1.xpose.msra.mxu0 0.0
    %758 = vmatprep.subr.mxu0 0.0
    %759 = vmatpush1.xpose.msra.mxu0 0.0
    %760 = vmatprep.subr.mxu0 0.0
    %761 = vmatpush1.xpose.msra.mxu0 0.0
    %762 = vmatprep.subr.mxu0 0.0
    %763 = vmatpush1.xpose.msra.mxu0 0.0
    %764 = vmatprep.subr.mxu0 0.0
    %765 = vmatpush1.xpose.msra.mxu0 0.0
    %766 = vmatprep.subr.mxu0 0.0
    %767 = vmatpush1.xpose.msra.mxu0 0.0
    %768 = vmatprep.subr.mxu0 0.0
    %769 = vmatpush1.xpose.msra.mxu0 0.0
    %770 = vmatprep.subr.mxu0 0.0
    %771 = vmatpush1.xpose.msra.mxu0 0.0
    %772 = vmatprep.subr.mxu0 0.0
    %773 = vmatpush1.xpose.msra.mxu0 0.0
    %774 = vmatprep.subr.mxu0 0.0
    %775 = vmatpush1.xpose.msra.mxu0 0.0
    %776 = vmatprep.subr.mxu0 0.0
    %777 = vmatpush1.xpose.msra.mxu0 %v750
    %778 = vmatprep.subr.mxu0 0.0
    %779 = vmatpush1.xpose.msra.mxu0 %v747
    %780 = vmatprep.subr.mxu0 0.0
    %781 = vmatpush1.xpose.msra.mxu0 %v744
    %782 = vmatprep.subr.mxu0 0.0
    %783 = vmatpush1.xpose.msra.mxu0 %v741
    %784 = vmatprep.subr.mxu0 0.0
    %785 = vmatpush2.xpose.msra.mxu0 0.0
    %786 = vmatprep.subr.mxu0 0.0
    %787 = vmatpush2.xpose.msra.mxu0 0.0
    %788 = vmatprep.subr.mxu0 0.0
    %789 = vmatpush2.xpose.msra.mxu0 0.0
    %790 = vmatprep.subr.mxu0 0.0
    %791 = vmatpush2.xpose.msra.mxu0 0.0
    %792 = vmatprep.subr.mxu0 0.0
    %793 = vmatpush2.xpose.msra.mxu0 0.0
    %794 = vmatprep.subr.mxu0 0.0
    %795 = vmatpush2.xpose.msra.mxu0 0.0
    %796 = vmatprep.subr.mxu0 0.0
    %797 = vmatpush2.xpose.msra.mxu0 0.0
    %798 = vmatprep.subr.mxu0 0.0
    %799 = vmatpush2.xpose.msra.mxu0 0.0
    %800 = vmatprep.subr.mxu0 0.0
    %801 = vmatpush2.xpose.msra.mxu0 0.0
    %802 = vmatprep.subr.mxu0 0.0
    %803 = vmatpush2.xpose.msra.mxu0 0.0
    %804 = vmatprep.subr.mxu0 0.0
    %805 = vmatpush2.xpose.msra.mxu0 0.0
    %806 = vmatprep.subr.mxu0 0.0
    %807 = vmatpush2.xpose.msra.mxu0 0.0
    %808 = vmatprep.subr.mxu0 0.0
    %809 = vmatpush2.xpose.msra.mxu0 0.0
    %810 = vmatprep.subr.mxu0 0.0
    %811 = vmatpush2.xpose.msra.mxu0 0.0
    %812 = vmatprep.subr.mxu0 0.0
    %813 = vmatpush2.xpose.msra.mxu0 0.0
    %814 = vmatprep.subr.mxu0 0.0
    %815 = vmatpush2.xpose.msra.mxu0 0.0
    %816 = vmatprep.mubr.f32.mxu0 0.0
    %817 = vmatmul.mubr.f32.gmra.mxu0 %v287
    %v818 = vpop.f32.mrf.mxu0
    %v819 = vadd.f32 0.0, %v818
    %v820 = vpop.f32.mrf.mxu0
    %821 = vmatprep.mubr.f32.mxu0 0.0
    %822 = vmatmul.mubr.f32.gmra.mxu0 %v290
    %v823 = vpop.f32.mrf.mxu0
    %v824 = vadd.f32 0.0, %v823
    %v825 = vpop.f32.mrf.mxu0
    %826 = vdwg.mxu0
    %v828 = vsel %vm87, %v562, 0
    %v831 = vsel %vm87, %v563, 0
    %v834 = vsel %vm87, %v564, 0
    %v837 = vsel %vm87, %v565, 0
    %839 = vmatprep.subr.mxu0 0.0
    %840 = vmatpush1.xpose.msra.mxu0 0.0
    %841 = vmatprep.subr.mxu0 0.0
    %842 = vmatpush1.xpose.msra.mxu0 0.0
    %843 = vmatprep.subr.mxu0 0.0
    %844 = vmatpush1.xpose.msra.mxu0 0.0
    %845 = vmatprep.subr.mxu0 0.0
    %846 = vmatpush1.xpose.msra.mxu0 0.0
    %847 = vmatprep.subr.mxu0 0.0
    %848 = vmatpush1.xpose.msra.mxu0 0.0
    %849 = vmatprep.subr.mxu0 0.0
    %850 = vmatpush1.xpose.msra.mxu0 0.0
    %851 = vmatprep.subr.mxu0 0.0
    %852 = vmatpush1.xpose.msra.mxu0 0.0
    %853 = vmatprep.subr.mxu0 0.0
    %854 = vmatpush1.xpose.msra.mxu0 0.0
    %855 = vmatprep.subr.mxu0 0.0
    %856 = vmatpush1.xpose.msra.mxu0 0.0
    %857 = vmatprep.subr.mxu0 0.0
    %858 = vmatpush1.xpose.msra.mxu0 0.0
    %859 = vmatprep.subr.mxu0 0.0
    %860 = vmatpush1.xpose.msra.mxu0 0.0
    %861 = vmatprep.subr.mxu0 0.0
    %862 = vmatpush1.xpose.msra.mxu0 0.0
    %863 = vmatprep.subr.mxu0 0.0
    %864 = vmatpush1.xpose.msra.mxu0 %v837
    %865 = vmatprep.subr.mxu0 0.0
    %866 = vmatpush1.xpose.msra.mxu0 %v834
    %867 = vmatprep.subr.mxu0 0.0
    %868 = vmatpush1.xpose.msra.mxu0 %v831
    %869 = vmatprep.subr.mxu0 0.0
    %870 = vmatpush1.xpose.msra.mxu0 %v828
    %871 = vmatprep.subr.mxu0 0.0
    %872 = vmatpush2.xpose.msra.mxu0 0.0
    %873 = vmatprep.subr.mxu0 0.0
    %874 = vmatpush2.xpose.msra.mxu0 0.0
    %875 = vmatprep.subr.mxu0 0.0
    %876 = vmatpush2.xpose.msra.mxu0 0.0
    %877 = vmatprep.subr.mxu0 0.0
    %878 = vmatpush2.xpose.msra.mxu0 0.0
    %879 = vmatprep.subr.mxu0 0.0
    %880 = vmatpush2.xpose.msra.mxu0 0.0
    %881 = vmatprep.subr.mxu0 0.0
    %882 = vmatpush2.xpose.msra.mxu0 0.0
    %883 = vmatprep.subr.mxu0 0.0
    %884 = vmatpush2.xpose.msra.mxu0 0.0
    %885 = vmatprep.subr.mxu0 0.0
    %886 = vmatpush2.xpose.msra.mxu0 0.0
    %887 = vmatprep.subr.mxu0 0.0
    %888 = vmatpush2.xpose.msra.mxu0 0.0
    %889 = vmatprep.subr.mxu0 0.0
    %890 = vmatpush2.xpose.msra.mxu0 0.0
    %891 = vmatprep.subr.mxu0 0.0
    %892 = vmatpush2.xpose.msra.mxu0 0.0
    %893 = vmatprep.subr.mxu0 0.0
    %894 = vmatpush2.xpose.msra.mxu0 0.0
    %895 = vmatprep.subr.mxu0 0.0
    %896 = vmatpush2.xpose.msra.mxu0 0.0
    %897 = vmatprep.subr.mxu0 0.0
    %898 = vmatpush2.xpose.msra.mxu0 0.0
    %899 = vmatprep.subr.mxu0 0.0
    %900 = vmatpush2.xpose.msra.mxu0 0.0
    %901 = vmatprep.subr.mxu0 0.0
    %902 = vmatpush2.xpose.msra.mxu0 0.0
    %903 = vmatprep.mubr.f32.mxu0 0.0
    %904 = vmatmul.mubr.f32.gmra.mxu0 %v386
    %v905 = vpop.f32.mrf.mxu0
    %v906 = vadd.f32 0.0, %v905
    %v907 = vpop.f32.mrf.mxu0
    %908 = vmatprep.mubr.f32.mxu0 0.0
    %909 = vmatmul.mubr.f32.gmra.mxu0 %v389
    %v910 = vpop.f32.mrf.mxu0
    %v911 = vadd.f32 0.0, %v910
    %v912 = vpop.f32.mrf.mxu0
    %913 = vdwg.mxu0
    %vm914 = vcmask 261120
    %v915 = vsel %vm914, %v645, -inf
    %916 = vmax.xlane.f32.xlu0 %v915
    %v917 = vpop.xlane.xlu0 %916
    %v918 = vsel %vm914, %v650, -inf
    %919 = vmax.xlane.f32.xlu0 %v918
    %v920 = vpop.xlane.xlu0 %919
    %v921 = vsel %vm914, %v732, -inf
    %922 = vmax.xlane.f32.xlu0 %v921
    %v923 = vpop.xlane.xlu0 %922
    %v924 = vsel %vm914, %v737, -inf
    %925 = vmax.xlane.f32.xlu0 %v924
    %v926 = vpop.xlane.xlu0 %925
    %v927 = vsel %vm914, %v819, -inf
    %928 = vmax.xlane.f32.xlu0 %v927
    %v929 = vpop.xlane.xlu0 %928
    %v930 = vsel %vm914, %v824, -inf
    %931 = vmax.xlane.f32.xlu0 %v930
    %v932 = vpop.xlane.xlu0 %931
    %v933 = vsel %vm914, %v906, -inf
    %934 = vmax.xlane.f32.xlu0 %v933
    %v935 = vpop.xlane.xlu0 %934
    %v936 = vsel %vm914, %v911, -inf
    %937 = vmax.xlane.f32.xlu0 %v936
    %v938 = vpop.xlane.xlu0 %937
    %v939 = vadd.f32 %v917, %v920
    %v940 = vrot.slane %v939, 4
    %v941 = vadd.f32 %v939, %v940
    %v942 = vrot.slane %v941, 2
    %v943 = vadd.f32 %v941, %v942
    %v944 = vrot.slane %v943, 1
    %v945 = vadd.f32 %v943, %v944
    %v946 = vadd.f32 %v923, %v926
    %v947 = vrot.slane %v946, 4
    %v948 = vadd.f32 %v946, %v947
    %v949 = vrot.slane %v948, 2
    %v950 = vadd.f32 %v948, %v949
    %v951 = vrot.slane %v950, 1
    %v952 = vadd.f32 %v950, %v951
    %v953 = vadd.f32 %v929, %v932
    %v954 = vrot.slane %v953, 4
    %v955 = vadd.f32 %v953, %v954
    %v956 = vrot.slane %v955, 2
    %v957 = vadd.f32 %v955, %v956
    %v958 = vrot.slane %v957, 1
    %v959 = vadd.f32 %v957, %v958
    %v960 = vadd.f32 %v935, %v938
    %v961 = vrot.slane %v960, 4
    %v962 = vadd.f32 %v960, %v961
    %v963 = vrot.slane %v962, 2
    %v964 = vadd.f32 %v962, %v963
    %v965 = vrot.slane %v964, 1
    %v966 = vadd.f32 %v964, %v965
    %v971 = vsel %vm541, %v952, %v945
    %v972 = vsel %vm543, %v959, %v971
    %v973 = vsel %vm545, %v966, %v972
    %vm975 = vcmask 11272
    %976 = vst.msk [vmem:[%s3] sm:$0xf] %vm975, %v973
    // Predicated region
    $region26: #{tpu_custom_call.1} parent=1 // pred_check
      _
    $region27: #{tpu_custom_call.1} parent=1 // pred_check_branch
      %978 = sbr.rel (0) target = $region29
    $region28: #{tpu_custom_call.1} parent=1 // pred_region
      _
    $region29: #{tpu_custom_call.1} parent=1 // pred_fallthru
      _
    // Predicated region
    $region30: #{tpu_custom_call.1} parent=1 // pred_check
      _
    $region31: #{tpu_custom_call.1} parent=1 // pred_check_branch
      %980 = sbr.rel (0) target = $region33
    $region32: #{tpu_custom_call.1} parent=1 // pred_region
      _
    $region33: #{tpu_custom_call.1} parent=1 // pred_fallthru
      _
    %981 = vsyncpa [#allocation3], 1
    %982 = vsyncpa [#allocation5], 1

</llo_original>
